<compile_context>
chip_gen: v7x
topology: tpu7x:2x2x1
jax: 0.10.0
libtpu: 0.0.40
codegen_flags: <defaults>
</compile_context>

<pallas_src>
import math

import numpy as np
import jax
import jax.numpy as jnp
from jax.experimental import pallas as pl
from jax.experimental.pallas import tpu as pltpu


def _scale_offset_kernel(x_ref, w_ref, b_ref, o_ref):
    # Elementwise affine on the current (row_block, folded_hidden) tile.
    x = x_ref[...].astype(jnp.float32)
    w = w_ref[...].astype(jnp.float32)   # (1, folded_hidden), broadcasts over rows
    b = b_ref[...].astype(jnp.float32)
    o_ref[...] = (x * w + b).astype(o_ref.dtype)


def _largest_aligned_divisor(n, cap):
    """Largest multiple of 8 that divides n (n is a multiple of 8) and is <= cap."""
    d = max(8, (cap // 8) * 8)
    while d >= 8:
        if n % d == 0:
            return d
        d -= 8
    return 8


def scale_offset(x, weight, bias, *, target_tile_bytes=2 * 1024 * 1024):
    """Apply y = x * weight + bias along the last dimension.

    x:      (..., hidden)
    weight: (hidden,)
    bias:   (hidden,)
    """
    orig_shape = x.shape
    hidden = orig_shape[-1]
    rows = int(np.prod(orig_shape[:-1], dtype=np.int64))
    itemsize = jnp.dtype(x.dtype).itemsize

    # --- lane folding: make the last dim a multiple of 128 lanes -------------
    K = 128 // math.gcd(hidden, 128)      # fold factor (1 if hidden % 128 == 0)
    fh = hidden * K                       # folded hidden, multiple of 128
    frows = pl.cdiv(rows, K)              # folded row count (pre-padding)
    frows8 = ((frows + 7) // 8) * 8       # pad folded rows to sublane multiple
    rows_padded = frows8 * K

    # --- row-block selection from the VMEM budget ----------------------------
    rb_budget = max(8, (target_tile_bytes // (fh * itemsize)) // 8 * 8)
    rb_cap = min(rb_budget, frows8)
    if frows8 >= 16:
        # Keep >= 2 grid steps so v7x's two TensorCores can both be used.
        rb_cap = min(rb_cap, max(8, (frows8 // 2) // 8 * 8))
    rb = _largest_aligned_divisor(frows8, rb_cap)
    grid = frows8 // rb

    # --- prepare lane-dense operands ------------------------------------------
    x2 = x.reshape(rows, hidden)
    if rows_padded != rows:
        x2 = jnp.pad(x2, ((0, rows_padded - rows), (0, 0)))
    xf = x2.reshape(frows8, fh)
    wf = jnp.tile(weight.reshape(1, hidden), (1, K))   # (1, fh)
    bf = jnp.tile(bias.reshape(1, hidden), (1, K))     # (1, fh)

    out = pl.pallas_call(
        _scale_offset_kernel,
        out_shape=jax.ShapeDtypeStruct((frows8, fh), x.dtype),
        grid_spec=pl.GridSpec(
            grid=(grid,),
            in_specs=[
                pl.BlockSpec((rb, fh), lambda i: (i, 0)),
                pl.BlockSpec((1, fh), lambda i: (0, 0)),   # gamma: fetched once, stays resident
                pl.BlockSpec((1, fh), lambda i: (0, 0)),   # beta
            ],
            out_specs=pl.BlockSpec((rb, fh), lambda i: (i, 0)),
        ),
        compiler_params=pltpu.CompilerParams(
            dimension_semantics=("parallel",),
        ),
    )(xf, wf, bf)

    out = out.reshape(rows_padded, hidden)
    if rows_padded != rows:
        out = out[:rows]
    return out.reshape(orig_shape)


if __name__ == "__main__":
    # Small shapes consistent with the module: (batch, seq, hidden)
    batch, seq, hidden = 2, 8, 32

    key = jax.random.PRNGKey(0)
    kx, kw, kb, kx2 = jax.random.split(key, 4)
    x = jax.random.normal(kx, (batch, seq, hidden), dtype=jnp.float32)

    # ScaleOffset.__init__ default is weight=ones, bias=zeros; use random
    # gamma/beta here (deterministic from PRNGKey(0)) to make the check non-trivial.
    weight = 1.0 + 0.1 * jax.random.normal(kw, (hidden,), dtype=jnp.float32)
    bias = 0.1 * jax.random.normal(kb, (hidden,), dtype=jnp.float32)

    y = scale_offset(x, weight, bias)
    y = jax.block_until_ready(y)
    y_ref = x * weight + bias
    assert jnp.allclose(y, y_ref, atol=1e-6), "mismatch vs reference (aligned case)"

    # Ragged-rows case (rows not a multiple of the fold/block) exercises the padding path.
    x_odd = jax.random.normal(kx2, (3, 5, hidden), dtype=jnp.float32)
    y_odd = jax.block_until_ready(scale_offset(x_odd, weight, bias))
    y_odd_ref = x_odd * weight + bias
    assert jnp.allclose(y_odd, y_odd_ref, atol=1e-6), "mismatch vs reference (ragged case)"

    print("KERNEL_OK")
</pallas_src>

<mosaic_0001>
module attributes {stable_mosaic.version = 11 : i64} {
  func.func @_scale_offset_kernel(%arg0: i32, %arg1: memref<8x128xf32, #tpu.memory_space<vmem>>, %arg2: memref<1x128xf32, #tpu.memory_space<vmem>>, %arg3: memref<1x128xf32, #tpu.memory_space<vmem>>, %arg4: memref<8x128xf32, #tpu.memory_space<vmem>>) attributes {dimension_semantics = [#tpu.dimension_semantics<parallel>], iteration_bounds = array<i64: 1>, scalar_prefetch = 0 : i64, scratch_operands = 0 : i64, tpu.core_type = #tpu.core_type<tc>, window_params = [{transform_indices = @transform_0, window_bounds = array<i64: 8, 128>}, {pipeline_mode = #tpu.pipeline_mode<synchronous>, transform_indices = @transform_1, window_bounds = array<i64: 1, 128>}, {pipeline_mode = #tpu.pipeline_mode<synchronous>, transform_indices = @transform_2, window_bounds = array<i64: 1, 128>}, {transform_indices = @transform_3, window_bounds = array<i64: 8, 128>}]} {
    %c0 = arith.constant 0 : index
    %c0_0 = arith.constant 0 : index
    %0 = vector.load %arg1[%c0, %c0_0] : memref<8x128xf32, #tpu.memory_space<vmem>>, vector<8x128xf32>
    %c0_1 = arith.constant 0 : index
    %c0_2 = arith.constant 0 : index
    %1 = vector.load %arg2[%c0_1, %c0_2] : memref<1x128xf32, #tpu.memory_space<vmem>>, vector<1x128xf32>
    %c0_3 = arith.constant 0 : index
    %c0_4 = arith.constant 0 : index
    %2 = vector.load %arg3[%c0_3, %c0_4] : memref<1x128xf32, #tpu.memory_space<vmem>>, vector<1x128xf32>
    %3 = vector.broadcast %1 : vector<1x128xf32> to vector<8x128xf32>
    %4 = arith.mulf %0, %3 : vector<8x128xf32>
    %5 = vector.broadcast %2 : vector<1x128xf32> to vector<8x128xf32>
    %6 = arith.addf %4, %5 : vector<8x128xf32>
    %c0_5 = arith.constant 0 : index
    %c0_6 = arith.constant 0 : index
    %7 = vector.load %arg4[%c0_5, %c0_6] : memref<8x128xf32, #tpu.memory_space<vmem>>, vector<8x128xf32>
    tpu.vector_store %arg4[%c0_5, %c0_6], %6 {strides = array<i32>} : memref<8x128xf32, #tpu.memory_space<vmem>>, vector<8x128xf32>,
    return
  }
  func.func @transform_0(%arg0: i32) -> (i32, i32) {
    %c0_i32 = arith.constant 0 : i32
    %c0_i32_0 = arith.constant 0 : i32
    return %arg0, %c0_i32 : i32, i32
  }
  func.func @transform_1(%arg0: i32) -> (i32, i32) {
    %c0_i32 = arith.constant 0 : i32
    %c0_i32_0 = arith.constant 0 : i32
    %c0_i32_1 = arith.constant 0 : i32
    return %c0_i32, %c0_i32_0 : i32, i32
  }
  func.func @transform_2(%arg0: i32) -> (i32, i32) {
    %c0_i32 = arith.constant 0 : i32
    %c0_i32_0 = arith.constant 0 : i32
    %c0_i32_1 = arith.constant 0 : i32
    return %c0_i32, %c0_i32_0 : i32, i32
  }
  func.func @transform_3(%arg0: i32) -> (i32, i32) {
    %c0_i32 = arith.constant 0 : i32
    %c0_i32_0 = arith.constant 0 : i32
    return %arg0, %c0_i32 : i32, i32
  }
}

</mosaic_0001>

<llo_original>
// kernel: tpu_custom_call.1
$region0: #{tpu_custom_call.1}
  #allocation0 [shape = 'u32[]', space=smem, size = 0x4, offset = 0x4, fixed_abs, tag = 'smem constant byte address 0x4 - core index']
  #allocation1 [shape = 'u32[144,128]{1,0:T(1,128)}', space=vmem, size = 0x12000, scoped, tag = 'internal scratch']
  %s0 = inlined_call_operand.hbm [shape: f32[8,128], index: 0, kind: input, shape index: {}]
  %s1 = inlined_call_operand.vmem [shape: f32[1,128], index: 1, kind: input, shape index: {}]
  %s2 = inlined_call_operand.vmem [shape: f32[1,128], index: 2, kind: input, shape index: {}]
  %s3 = inlined_call_operand.hbm [shape: f32[8,128], index: 3, kind: output, shape index: {}]
  %s4 = sld [smem:[#allocation0]]
  $region26: #{tpu_custom_call.1} parent=0
    _
  %s6 = ssub.s32 1, %s4
  %s7 = scalar_select 0, %s6, %s4
  $region1: #{tpu_custom_call.1} parent=0
    #allocation2 [shape = 'u8[4096]{0}', space=vmem, size = 0x1000, scoped, tag = 'input window, operand 0, single buffered']
    #allocation3 [shape = 's32[1]{0}', space=sflag, size = 0x4, scoped, tag = 'scoped memory for tpu_custom_call.1']
    #allocation4 [shape = 's32[1]{0}', space=sflag, size = 0x4, scoped, tag = 'scoped memory for tpu_custom_call.1']
    #allocation5 [shape = 'u8[4096]{0}', space=vmem, size = 0x1000, scoped, tag = 'output window, operand 0, single buffered']
    %8 = vsyncpa [#allocation3], 0
    %9 = vsyncpa [#allocation4], 0
    // Predicated region
    $region2: #{tpu_custom_call.1} parent=1 // pred_check
      _
    $region3: #{tpu_custom_call.1} parent=1 // pred_check_branch
      %11 = sbr.rel (0) target = $region5
    $region4: #{tpu_custom_call.1} parent=1 // pred_region
      %s13 = ssub.s32 128, 128
      %14 = vsyncadd [#allocation3], %s13
      %s16 = sshll.u32 [#allocation2], 4
      %s17 = int_to_ptr.vmem [resolvable:$true] %s16
      %19 = dma.hbm_to_vmem [thread:$0]  %s0, 128, %s17, [#allocation3]
    $region5: #{tpu_custom_call.1} parent=1 // pred_fallthru
      _
    // Predicated region
    $region6: #{tpu_custom_call.1} parent=1 // pred_check
      _
    $region7: #{tpu_custom_call.1} parent=1 // pred_check_branch
      %21 = sbr.rel (0) target = $region9
    $region8: #{tpu_custom_call.1} parent=1 // pred_region
      _
    $region9: #{tpu_custom_call.1} parent=1 // pred_fallthru
      _
    // Predicated region
    $region10: #{tpu_custom_call.1} parent=1 // pred_check
      _
    $region11: #{tpu_custom_call.1} parent=1 // pred_check_branch
      %23 = sbr.rel (0) target = $region13
    $region12: #{tpu_custom_call.1} parent=1 // pred_region
      _
    $region13: #{tpu_custom_call.1} parent=1 // pred_fallthru
      _
    // Predicated region
    $region14: #{tpu_custom_call.1} parent=1 // pred_check
      _
    $region15: #{tpu_custom_call.1} parent=1 // pred_check_branch
      %25 = sbr.rel (0) target = $region17
    $region16: #{tpu_custom_call.1} parent=1 // pred_region
      %26 = dma.done [#allocation3], 128
    $region17: #{tpu_custom_call.1} parent=1 // pred_fallthru
      _
    %v27 = vld [vmem:[#allocation2] sm:$0xff]
    %v28 = vld [vmem:[%s1] sm:$0x1]
    %v29 = vld [vmem:[%s2] sm:$0x1]
    %v31 = vlaneseq
    %v32 = vshrl.u32 %v31, 7
    %v33 = vsub.s32 0, %v32
    %v34 = vrot.slane %v28, %v33
    %v36 = vmul.f32 %v27, %v34
    %v38 = vlaneseq
    %v39 = vshrl.u32 %v38, 7
    %v40 = vsub.s32 0, %v39
    %v41 = vrot.slane %v29, %v40
    %v43 = vadd.f32 %v36, %v41
    %44 = vst [vmem:[#allocation5] sm:$0xff] %v43
    // Predicated region
    $region18: #{tpu_custom_call.1} parent=1 // pred_check
      _
    $region19: #{tpu_custom_call.1} parent=1 // pred_check_branch
      %46 = sbr.rel (0) target = $region21
    $region20: #{tpu_custom_call.1} parent=1 // pred_region
      %s48 = ssub.s32 128, 128
      %49 = vsyncadd [#allocation4], %s48
      %s51 = sshll.u32 [#allocation5], 4
      %s52 = int_to_ptr.vmem [resolvable:$true] %s51
      %54 = dma.vmem_to_hbm [thread:$0]  %s52, 128, %s3, [#allocation4]
    $region21: #{tpu_custom_call.1} parent=1 // pred_fallthru
      _
    // Predicated region
    $region22: #{tpu_custom_call.1} parent=1 // pred_check
      _
    $region23: #{tpu_custom_call.1} parent=1 // pred_check_branch
      %56 = sbr.rel (0) target = $region25
    $region24: #{tpu_custom_call.1} parent=1 // pred_region
      %57 = dma.done [#allocation4], 128
    $region25: #{tpu_custom_call.1} parent=1 // pred_fallthru
      _
    %58 = vsyncpa [#allocation3], 1
    %59 = vsyncpa [#allocation4], 1

</llo_original>
